<compile_context>
chip_gen: v6e
topology: v6e:2x2x1
jax: 0.10.0
libtpu: 0.0.40
codegen_flags: <defaults>
</compile_context>

<pallas_src>
import functools
import math

import jax
import jax.numpy as jnp
from jax import lax
from jax.experimental import pallas as pl
from jax.experimental.pallas import tpu as pltpu


_LANE = 128
_SUBLANE = 8


def gcn_kernel(support_ref, adj_ref, b1_ref, w2_ref, b2_ref, out_ref, acc_ref,
               *, rem_k, tk):
    """One (row-tile i, column-tile k) grid step.

    support_ref: (TK, n_hidden) slice of the hoisted x@W1 (streamed over k)
    adj_ref:     (TM, TK) adjacency block (the only O(N^2) stream)
    acc_ref:     (TM, n_hidden) float32 accumulator scratch (persists over k)
    """
    k = pl.program_id(1)
    last_k = pl.num_programs(1) - 1

    @pl.when(k == 0)
    def _init():
        acc_ref[...] = jnp.zeros_like(acc_ref)

    a = adj_ref[...]
    s = support_ref[...]
    if rem_k:
        # N % TK != 0: the last column tile is partial.  Pallas leaves the padded
        # region of the VMEM buffers undefined, so zero BOTH operands' padded
        # columns/rows before accumulating (guards against inf/NaN garbage).
        valid = jnp.where(k == last_k, rem_k, tk)
        col_ids = lax.broadcasted_iota(jnp.int32, a.shape, 1)
        a = jnp.where(col_ids < valid, a, jnp.zeros_like(a))
        row_ids = lax.broadcasted_iota(jnp.int32, s.shape, 0)
        s = jnp.where(row_ids < valid, s, jnp.zeros_like(s))

    # Partial adj@support contribution for this column tile (f32 accumulation).
    acc_ref[...] += jnp.dot(a, s, preferred_element_type=jnp.float32)

    @pl.when(k == last_k)
    def _finalize():
        # h = relu(adj @ support + b1)
        h = jnp.maximum(acc_ref[...] + b1_ref[...], 0.0)
        # TODO(synk): dropout is identity in eval mode (training=False); training-mode
        # dropout would need pltpu.prng_seed / prng_random_bits inside the kernel.
        # out = h @ W2^T + b2, contracting n_hidden against W2's lane-dense last axis
        # (PyTorch Linear layout, no wrapper-side transpose).
        out = lax.dot_general(
            h, w2_ref[...],
            dimension_numbers=(((1,), (1,)), ((), ())),
            preferred_element_type=jnp.float32,
        )
        out_ref[...] = (out + b2_ref[...]).astype(out_ref.dtype)


def _round_up(v, m):
    return ((v + m - 1) // m) * m


def _vmem_budget_bytes():
    # Generation-aware usable-VMEM target: ~48 MiB on v7x (64 MiB/TC),
    # ~100+ MiB on v5e/v6e (128 MiB).  Conservative fallback if the query fails.
    try:
        cap = int(pltpu.get_tpu_info().vmem_capacity_bytes)
    except Exception:
        cap = 64 * 1024 * 1024
    return max(16 * 1024 * 1024, min(int(cap * 0.8), cap - 16 * 1024 * 1024))


def _choose_tiles(n, n_hidden, out_features, adj_bytes):
    """Solve (TM, TK) from the per-generation VMEM budget."""
    budget = _vmem_budget_bytes()

    # Row tile: >= 2 tiles whenever n > 256 so the "parallel" axis has work for both
    # v7x TensorCores; cap at 1024 (amortizes ~0.35us/step grid overhead).
    if n <= 256:
        tm = n
    else:
        tm = min(1024, _round_up(pl.cdiv(n, 2), _LANE))
    # Column tile: full width when small (no reduction masking needed), otherwise a
    # large multiple of 128 so VMEM stops scaling with N.
    tk = n if n <= 2048 else 2048

    def vmem_use(tm_, tk_):
        return (2 * tm_ * tk_ * adj_bytes              # adj tile, double-buffered
                + 2 * tk_ * n_hidden * 4               # support stream, double-buffered
                + 2 * tm_ * out_features * 4           # out tile, double-buffered
                + tm_ * n_hidden * 4                   # f32 accumulator scratch
                + tm_ * (n_hidden + out_features) * 4  # in-register intermediates
                + (n_hidden + out_features * n_hidden + out_features) * 4)  # residents

    # Shrink the adj tile until it fits the budget (TK first, then TM).
    while vmem_use(tm, tk) > budget:
        if tk > _LANE and tk >= tm:
            tk = max(_LANE, _round_up(tk // 2, _LANE))
        elif tm > _SUBLANE:
            tm = max(_SUBLANE, _round_up(tm // 2, _SUBLANE))
        else:
            break

    vmem_limit = min(budget, int(vmem_use(tm, tk) * 1.5) + (2 << 20))
    vmem_limit = max(vmem_limit, 8 * 1024 * 1024)
    return tm, tk, vmem_limit


@functools.partial(jax.jit, static_argnames=("adj_in_bf16", "tile_override"))
def gcn_finding_feature(x, adj, w1, b1, w2, b2, adj_in_bf16=False,
                        tile_override=None):
    """x: [N, n_embed], adj: [N, N], w1: [n_embed, n_hidden], b1: [n_hidden],
    w2: [out_features, n_hidden] (PyTorch Linear layout), b2: [out_features].

    adj_in_bf16=True streams the adjacency in bfloat16 (≈2x less HBM traffic on the
    dominant stream; f32 accumulation).  Off by default to match fp32 semantics.
    """
    n, _ = x.shape
    n_hidden = w1.shape[1]
    out_features = w2.shape[0]

    # Hoisted: support computed once by XLA (tiny vs. the N^2 adj stream), so the
    # kernel never redoes x@W1 per row tile.
    support = jnp.dot(x, w1).astype(jnp.float32)

    if adj_in_bf16:
        adj = adj.astype(jnp.bfloat16)
    adj_bytes = jnp.dtype(adj.dtype).itemsize

    b1_2d = b1.reshape(1, n_hidden).astype(jnp.float32)
    b2_2d = b2.reshape(1, out_features).astype(jnp.float32)

    if tile_override is not None:
        tm, tk = tile_override
        _, _, vmem_limit = _choose_tiles(n, n_hidden, out_features, adj_bytes)
    else:
        tm, tk, vmem_limit = _choose_tiles(n, n_hidden, out_features, adj_bytes)

    grid = (pl.cdiv(n, tm), pl.cdiv(n, tk))
    rem_k = n % tk if tk < n else 0

    kernel = functools.partial(gcn_kernel, rem_k=rem_k, tk=tk)

    cost = pl.CostEstimate(
        flops=2 * n * n * n_hidden + 2 * n * n_hidden * out_features,
        transcendentals=0,
        bytes_accessed=(adj_bytes * n * n
                        + 4 * (n * n_hidden + n * out_features
                               + out_features * n_hidden + n_hidden + out_features)),
    )

    return pl.pallas_call(
        kernel,
        out_shape=jax.ShapeDtypeStruct((n, out_features), x.dtype),
        grid=grid,
        in_specs=[
            # support slice for this column tile (streamed over k, double-buffered).
            pl.BlockSpec((tk, n_hidden), lambda i, k: (k, 0)),
            # adj block — the only O(N^2) stream.
            pl.BlockSpec((tm, tk), lambda i, k: (i, k)),
            # Constant-index residents: single-buffer (index never changes).
            pl.BlockSpec((1, n_hidden), lambda i, k: (0, 0),
                         pipeline_mode=pl.Buffered(1)),
            pl.BlockSpec((out_features, n_hidden), lambda i, k: (0, 0),
                         pipeline_mode=pl.Buffered(1)),
            pl.BlockSpec((1, out_features), lambda i, k: (0, 0),
                         pipeline_mode=pl.Buffered(1)),
        ],
        out_specs=pl.BlockSpec((tm, out_features), lambda i, k: (i, 0)),
        scratch_shapes=[pltpu.VMEM((tm, n_hidden), jnp.float32)],
        compiler_params=pltpu.CompilerParams(
            dimension_semantics=("parallel", "arbitrary"),
            vmem_limit_bytes=int(vmem_limit),
        ),
        cost_estimate=cost,
    )(support, adj, b1_2d, w2, b2_2d)


def reference(x, adj, w1, b1, w2, b2):
    support = x @ w1
    h = jnp.maximum(adj @ support + b1, 0.0)
    return h @ w2.T + b2


if __name__ == "__main__":
    N = 256          # number of graph nodes
    n_embed = 32
    n_hidden = 32
    out_features = 16

    key = jax.random.PRNGKey(0)
    kx, kadj, kw1, kb1, kw2, kb2 = jax.random.split(key, 6)

    x = jax.random.normal(kx, (N, n_embed), dtype=jnp.float32)
    # Row-normalized dense adjacency (torch.spmm in the reference is a dense mm here).
    adj_raw = jax.random.uniform(kadj, (N, N), dtype=jnp.float32)
    adj = adj_raw / jnp.sum(adj_raw, axis=1, keepdims=True)

    # GraphConvolution_Finding params: uniform(-stdv, stdv), stdv = 1/sqrt(n_hidden)
    stdv = 1.0 / math.sqrt(n_hidden)
    w1 = jax.random.uniform(kw1, (n_embed, n_hidden), minval=-stdv, maxval=stdv,
                            dtype=jnp.float32)
    b1 = jax.random.uniform(kb1, (n_hidden,), minval=-stdv, maxval=stdv,
                            dtype=jnp.float32)

    # nn.Linear(n_hidden, out_features): weight ~ N(0, 0.05), bias U(-1/sqrt(fan_in), .)
    w2 = 0.05 * jax.random.normal(kw2, (out_features, n_hidden), dtype=jnp.float32)
    bbound = 1.0 / math.sqrt(n_hidden)
    b2 = jax.random.uniform(kb2, (out_features,), minval=-bbound, maxval=bbound,
                            dtype=jnp.float32)

    # (a) Default path: single (256, 256) block, fp32 adj — exact semantics.
    out = jax.block_until_ready(gcn_finding_feature(x, adj, w1, b1, w2, b2))
    ref = reference(x, adj, w1, b1, w2, b2)
    assert out.shape == (N, out_features)
    assert jnp.allclose(out, ref, atol=1e-5, rtol=1e-5), "mismatch vs reference (N=256)"

    # (b) Multi-tile + partial-tile path: N=320 with forced (128, 128) tiles exercises
    #     the column-tiled accumulator, the k-axis masking (320 % 128 != 0) and
    #     masked row stores.
    N2 = 320
    x2 = jax.random.normal(kx, (N2, n_embed), dtype=jnp.float32)
    adj2_raw = jax.random.uniform(kadj, (N2, N2), dtype=jnp.float32)
    adj2 = adj2_raw / jnp.sum(adj2_raw, axis=1, keepdims=True)
    out2 = jax.block_until_ready(
        gcn_finding_feature(x2, adj2, w1, b1, w2, b2, tile_override=(128, 128)))
    ref2 = reference(x2, adj2, w1, b1, w2, b2)
    assert jnp.allclose(out2, ref2, atol=1e-5, rtol=1e-5), "mismatch vs reference (N=320, tiled)"

    # (c) bf16 adj streaming (optional, halves the dominant HBM stream) — looser tol.
    out_bf16 = jax.block_until_ready(
        gcn_finding_feature(x, adj, w1, b1, w2, b2, adj_in_bf16=True))
    assert jnp.allclose(out_bf16, ref, atol=2e-2, rtol=2e-2), "mismatch vs reference (bf16 adj)"

    # (d) Tiny-graph sanity check (single small block, typical module usage).
    out_small = jax.block_until_ready(
        gcn_finding_feature(x[:8], adj[:8, :8], w1, b1, w2, b2))
    ref_small = reference(x[:8], adj[:8, :8], w1, b1, w2, b2)
    assert jnp.allclose(out_small, ref_small, atol=1e-5, rtol=1e-5), "mismatch vs reference (N=8)"

    print("KERNEL_OK")
</pallas_src>

<mosaic_0001>
module attributes {stable_mosaic.version = 11 : i64} {
  func.func @gcn_kernel(%arg0: i32, %arg1: i32, %arg2: memref<256x32xf32, #tpu.memory_space<vmem>>, %arg3: memref<256x256xf32, #tpu.memory_space<vmem>>, %arg4: memref<1x32xf32, #tpu.memory_space<vmem>>, %arg5: memref<16x32xf32, #tpu.memory_space<vmem>>, %arg6: memref<1x16xf32, #tpu.memory_space<vmem>>, %arg7: memref<256x16xf32, #tpu.memory_space<vmem>>, %arg8: memref<256x32xf32, #tpu.memory_space<vmem>>) attributes {dimension_semantics = [#tpu.dimension_semantics<parallel>, #tpu.dimension_semantics<arbitrary>], iteration_bounds = array<i64: 1, 1>, scalar_prefetch = 0 : i64, scratch_operands = 1 : i64, tpu.core_type = #tpu.core_type<tc>, window_params = [{transform_indices = @transform_0, window_bounds = array<i64: 256, 32>}, {transform_indices = @transform_1, window_bounds = array<i64: 256, 256>}, {pipeline_mode = #tpu.pipeline_mode<synchronous>, transform_indices = @transform_2, window_bounds = array<i64: 1, 32>}, {pipeline_mode = #tpu.pipeline_mode<synchronous>, transform_indices = @transform_3, window_bounds = array<i64: 16, 32>}, {pipeline_mode = #tpu.pipeline_mode<synchronous>, transform_indices = @transform_4, window_bounds = array<i64: 1, 16>}, {transform_indices = @transform_5, window_bounds = array<i64: 256, 16>}]} {
    %c0_i32 = arith.constant 0 : i32
    %0 = arith.cmpi eq, %arg1, %c0_i32 : i32
    %1 = arith.extui %0 : i1 to i32
    %c0_i32_0 = arith.constant 0 : i32
    %2 = arith.cmpi ne, %1, %c0_i32_0 : i32
    scf.if %2 {
      %cst_10 = arith.constant 0.000000e+00 : f32
      %12 = vector.broadcast %cst_10 : f32 to vector<256x32xf32>
      %c0_11 = arith.constant 0 : index
      %c0_12 = arith.constant 0 : index
      %13 = vector.load %arg8[%c0_11, %c0_12] : memref<256x32xf32, #tpu.memory_space<vmem>>, vector<256x32xf32>
      tpu.vector_store %arg8[%c0_11, %c0_12], %12 {strides = array<i32>} : memref<256x32xf32, #tpu.memory_space<vmem>>, vector<256x32xf32>,
    } else {
    }
    %c0 = arith.constant 0 : index
    %c0_1 = arith.constant 0 : index
    %3 = vector.load %arg3[%c0, %c0_1] : memref<256x256xf32, #tpu.memory_space<vmem>>, vector<256x256xf32>
    %c0_2 = arith.constant 0 : index
    %c0_3 = arith.constant 0 : index
    %4 = vector.load %arg2[%c0_2, %c0_3] : memref<256x32xf32, #tpu.memory_space<vmem>>, vector<256x32xf32>
    %c0_4 = arith.constant 0 : index
    %c0_5 = arith.constant 0 : index
    %5 = vector.load %arg8[%c0_4, %c0_5] : memref<256x32xf32, #tpu.memory_space<vmem>>, vector<256x32xf32>
    %cst = arith.constant dense<0.000000e+00> : vector<256x32xf32>
    %6 = tpu.matmul %3, %4, %cst {dimension_numbers = #tpu.dot_dimension_numbers<[1], [0], [0], [1], [0, 0, 1, 1], [], []>} : vector<256x256xf32>, vector<256x32xf32>, vector<256x32xf32> -> vector<256x32xf32>
    %7 = arith.addf %5, %6 : vector<256x32xf32>
    %c0_6 = arith.constant 0 : index
    %c0_7 = arith.constant 0 : index
    %8 = vector.load %arg8[%c0_6, %c0_7] : memref<256x32xf32, #tpu.memory_space<vmem>>, vector<256x32xf32>
    tpu.vector_store %arg8[%c0_6, %c0_7], %7 {strides = array<i32>} : memref<256x32xf32, #tpu.memory_space<vmem>>, vector<256x32xf32>,
    %c0_i32_8 = arith.constant 0 : i32
    %9 = arith.cmpi eq, %arg1, %c0_i32_8 : i32
    %10 = arith.extui %9 : i1 to i32
    %c0_i32_9 = arith.constant 0 : i32
    %11 = arith.cmpi ne, %10, %c0_i32_9 : i32
    scf.if %11 {
      %c0_10 = arith.constant 0 : index
      %c0_11 = arith.constant 0 : index
      %12 = vector.load %arg8[%c0_10, %c0_11] : memref<256x32xf32, #tpu.memory_space<vmem>>, vector<256x32xf32>
      %c0_12 = arith.constant 0 : index
      %c0_13 = arith.constant 0 : index
      %13 = vector.load %arg4[%c0_12, %c0_13] : memref<1x32xf32, #tpu.memory_space<vmem>>, vector<1x32xf32>
      %14 = vector.broadcast %13 : vector<1x32xf32> to vector<256x32xf32>
      %15 = arith.addf %12, %14 : vector<256x32xf32>
      %cst_14 = arith.constant 0.000000e+00 : f32
      %16 = vector.broadcast %cst_14 : f32 to vector<256x32xf32>
      %17 = arith.maximumf %15, %16 : vector<256x32xf32>
      %c0_15 = arith.constant 0 : index
      %c0_16 = arith.constant 0 : index
      %18 = vector.load %arg5[%c0_15, %c0_16] : memref<16x32xf32, #tpu.memory_space<vmem>>, vector<16x32xf32>
      %cst_17 = arith.constant dense<0.000000e+00> : vector<256x16xf32>
      %19 = tpu.matmul %17, %18, %cst_17 {dimension_numbers = #tpu.dot_dimension_numbers<[1], [1], [0], [0], [0, 0, 1, 0], [], []>} : vector<256x32xf32>, vector<16x32xf32>, vector<256x16xf32> -> vector<256x16xf32>
      %c0_18 = arith.constant 0 : index
      %c0_19 = arith.constant 0 : index
      %20 = vector.load %arg6[%c0_18, %c0_19] : memref<1x16xf32, #tpu.memory_space<vmem>>, vector<1x16xf32>
      %21 = vector.broadcast %20 : vector<1x16xf32> to vector<256x16xf32>
      %22 = arith.addf %19, %21 : vector<256x16xf32>
      %c0_20 = arith.constant 0 : index
      %c0_21 = arith.constant 0 : index
      %23 = vector.load %arg7[%c0_20, %c0_21] : memref<256x16xf32, #tpu.memory_space<vmem>>, vector<256x16xf32>
      tpu.vector_store %arg7[%c0_20, %c0_21], %22 {strides = array<i32>} : memref<256x16xf32, #tpu.memory_space<vmem>>, vector<256x16xf32>,
    } else {
    }
    return
  }
  func.func @transform_0(%arg0: i32, %arg1: i32) -> (i32, i32) {
    %c0_i32 = arith.constant 0 : i32
    %c0_i32_0 = arith.constant 0 : i32
    return %arg1, %c0_i32 : i32, i32
  }
  func.func @transform_1(%arg0: i32, %arg1: i32) -> (i32, i32) {
    %c0_i32 = arith.constant 0 : i32
    return %arg0, %arg1 : i32, i32
  }
  func.func @transform_2(%arg0: i32, %arg1: i32) -> (i32, i32) {
    %c0_i32 = arith.constant 0 : i32
    %c0_i32_0 = arith.constant 0 : i32
    %c0_i32_1 = arith.constant 0 : i32
    return %c0_i32, %c0_i32_0 : i32, i32
  }
  func.func @transform_3(%arg0: i32, %arg1: i32) -> (i32, i32) {
    %c0_i32 = arith.constant 0 : i32
    %c0_i32_0 = arith.constant 0 : i32
    %c0_i32_1 = arith.constant 0 : i32
    return %c0_i32, %c0_i32_0 : i32, i32
  }
  func.func @transform_4(%arg0: i32, %arg1: i32) -> (i32, i32) {
    %c0_i32 = arith.constant 0 : i32
    %c0_i32_0 = arith.constant 0 : i32
    %c0_i32_1 = arith.constant 0 : i32
    return %c0_i32, %c0_i32_0 : i32, i32
  }
  func.func @transform_5(%arg0: i32, %arg1: i32) -> (i32, i32) {
    %c0_i32 = arith.constant 0 : i32
    %c0_i32_0 = arith.constant 0 : i32
    return %arg0, %c0_i32 : i32, i32
  }
}

</mosaic_0001>

<llo_original>
// kernel: gcn_finding_feature.1
$region0: #{gcn_finding_feature.1}
  #allocation0 [shape = 'u32[]', space=smem, size = 0x4, offset = 0x4, fixed_abs, tag = 'smem constant byte address 0x4 - core index']
  #allocation1 [shape = 'u32[144,128]{1,0:T(1,128)}', space=vmem, size = 0x12000, scoped, tag = 'internal scratch']
  #allocation2 [shape = 'f32[256,32]{1,0:T(8,128)}', space=vmem, size = 0x20000, scoped, tag = 'scratch operand']
  %s0 = inlined_call_operand.vmem [shape: f32[256,32], index: 0, kind: input, shape index: {}]
  %s1 = inlined_call_operand.hbm [shape: f32[256,256], index: 1, kind: input, shape index: {}]
  %s2 = inlined_call_operand.vmem [shape: f32[1,32], index: 2, kind: input, shape index: {}]
  %s3 = inlined_call_operand.vmem [shape: f32[16,32], index: 3, kind: input, shape index: {}]
  %s4 = inlined_call_operand.vmem [shape: f32[1,16], index: 4, kind: input, shape index: {}]
  %s5 = inlined_call_operand.vmem [shape: f32[256,16], index: 5, kind: output, shape index: {}]
  %s6 = sld [smem:[#allocation0]]
  $region42: #{gcn_finding_feature.1} parent=0
    _
  %s8 = ssub.s32 1, %s6
  %s9 = scalar_select 0, %s8, %s6
  $region1: #{gcn_finding_feature.1} parent=0
    #allocation3 [shape = 'u8[262144]{0}', space=vmem, size = 0x40000, scoped, tag = 'input window, operand 1, single buffered']
    #allocation4 [shape = 's32[1]{0}', space=sflag, size = 0x4, scoped, tag = 'scoped memory for gcn_finding_feature.1']
    %10 = vsyncpa [#allocation4], 0
    // Predicated region
    $region2: #{gcn_finding_feature.1} parent=1 // pred_check
      _
    $region3: #{gcn_finding_feature.1} parent=1 // pred_check_branch
      %12 = sbr.rel (0) target = $region5
    $region4: #{gcn_finding_feature.1} parent=1 // pred_region
      _
    $region5: #{gcn_finding_feature.1} parent=1 // pred_fallthru
      _
    // Predicated region
    $region6: #{gcn_finding_feature.1} parent=1 // pred_check
      _
    $region7: #{gcn_finding_feature.1} parent=1 // pred_check_branch
      %14 = sbr.rel (0) target = $region9
    $region8: #{gcn_finding_feature.1} parent=1 // pred_region
      %s16 = ssub.s32 8192, 8192
      %17 = vsyncadd [#allocation4], %s16
      %s18 = sshll.u32 [#allocation3], 4
      %s19 = int_to_ptr.vmem [resolvable:$true] %s18
      %24 = dma.hbm_to_vmem [thread:$0]  %s1, 8192, %s19, [#allocation4], 256, 256, 16
    $region9: #{gcn_finding_feature.1} parent=1 // pred_fallthru
      _
    // Predicated region
    $region10: #{gcn_finding_feature.1} parent=1 // pred_check
      _
    $region11: #{gcn_finding_feature.1} parent=1 // pred_check_branch
      %26 = sbr.rel (0) target = $region13
    $region12: #{gcn_finding_feature.1} parent=1 // pred_region
      _
    $region13: #{gcn_finding_feature.1} parent=1 // pred_fallthru
      _
    // Predicated region
    $region14: #{gcn_finding_feature.1} parent=1 // pred_check
      _
    $region15: #{gcn_finding_feature.1} parent=1 // pred_check_branch
      %28 = sbr.rel (0) target = $region17
    $region16: #{gcn_finding_feature.1} parent=1 // pred_region
      _
    $region17: #{gcn_finding_feature.1} parent=1 // pred_fallthru
      _
    // Predicated region
    $region18: #{gcn_finding_feature.1} parent=1 // pred_check
      _
    $region19: #{gcn_finding_feature.1} parent=1 // pred_check_branch
      %30 = sbr.rel (0) target = $region21
    $region20: #{gcn_finding_feature.1} parent=1 // pred_region
      _
    $region21: #{gcn_finding_feature.1} parent=1 // pred_fallthru
      _
    // Predicated region
    $region22: #{gcn_finding_feature.1} parent=1 // pred_check
      _
    $region23: #{gcn_finding_feature.1} parent=1 // pred_check_branch
      %32 = sbr.rel (0) target = $region25
    $region24: #{gcn_finding_feature.1} parent=1 // pred_region
      %33 = dma.done [#allocation4], 8192
    $region25: #{gcn_finding_feature.1} parent=1 // pred_fallthru
      _
    %p34 = scmp.eq.s32.totalorder 0, 0
    // Predicated region
    $region26: #{gcn_finding_feature.1} parent=1 // pred_check
      %p35 = pneg %p34
    $region27: #{gcn_finding_feature.1} parent=1 // pred_check_branch
      %37 = sbr.rel (%p35) target = $region29
    $region28: #{gcn_finding_feature.1} parent=1 // pred_region
      %vm38 = vcmask 261120
      %39 = vst.msk [vmem:[#allocation2] sm:$0xff] %vm38, 0.0
      %40 = vst.msk [vmem:[#allocation2 + $0x8] sm:$0xff] %vm38, 0.0
      %41 = vst.msk [vmem:[#allocation2 + $0x10] sm:$0xff] %vm38, 0.0
      %42 = vst.msk [vmem:[#allocation2 + $0x18] sm:$0xff] %vm38, 0.0
      %43 = vst.msk [vmem:[#allocation2 + $0x20] sm:$0xff] %vm38, 0.0
      %44 = vst.msk [vmem:[#allocation2 + $0x28] sm:$0xff] %vm38, 0.0
      %45 = vst.msk [vmem:[#allocation2 + $0x30] sm:$0xff] %vm38, 0.0
      %46 = vst.msk [vmem:[#allocation2 + $0x38] sm:$0xff] %vm38, 0.0
      %47 = vst.msk [vmem:[#allocation2 + $0x40] sm:$0xff] %vm38, 0.0
      %48 = vst.msk [vmem:[#allocation2 + $0x48] sm:$0xff] %vm38, 0.0
      %49 = vst.msk [vmem:[#allocation2 + $0x50] sm:$0xff] %vm38, 0.0
      %50 = vst.msk [vmem:[#allocation2 + $0x58] sm:$0xff] %vm38, 0.0
      %51 = vst.msk [vmem:[#allocation2 + $0x60] sm:$0xff] %vm38, 0.0
      %52 = vst.msk [vmem:[#allocation2 + $0x68] sm:$0xff] %vm38, 0.0
      %53 = vst.msk [vmem:[#allocation2 + $0x70] sm:$0xff] %vm38, 0.0
      %54 = vst.msk [vmem:[#allocation2 + $0x78] sm:$0xff] %vm38, 0.0
      %55 = vst.msk [vmem:[#allocation2 + $0x80] sm:$0xff] %vm38, 0.0
      %56 = vst.msk [vmem:[#allocation2 + $0x88] sm:$0xff] %vm38, 0.0
      %57 = vst.msk [vmem:[#allocation2 + $0x90] sm:$0xff] %vm38, 0.0
      %58 = vst.msk [vmem:[#allocation2 + $0x98] sm:$0xff] %vm38, 0.0
      %59 = vst.msk [vmem:[#allocation2 + $0xa0] sm:$0xff] %vm38, 0.0
      %60 = vst.msk [vmem:[#allocation2 + $0xa8] sm:$0xff] %vm38, 0.0
      %61 = vst.msk [vmem:[#allocation2 + $0xb0] sm:$0xff] %vm38, 0.0
      %62 = vst.msk [vmem:[#allocation2 + $0xb8] sm:$0xff] %vm38, 0.0
      %63 = vst.msk [vmem:[#allocation2 + $0xc0] sm:$0xff] %vm38, 0.0
      %64 = vst.msk [vmem:[#allocation2 + $0xc8] sm:$0xff] %vm38, 0.0
      %65 = vst.msk [vmem:[#allocation2 + $0xd0] sm:$0xff] %vm38, 0.0
      %66 = vst.msk [vmem:[#allocation2 + $0xd8] sm:$0xff] %vm38, 0.0
      %67 = vst.msk [vmem:[#allocation2 + $0xe0] sm:$0xff] %vm38, 0.0
      %68 = vst.msk [vmem:[#allocation2 + $0xe8] sm:$0xff] %vm38, 0.0
      %69 = vst.msk [vmem:[#allocation2 + $0xf0] sm:$0xff] %vm38, 0.0
      %70 = vst.msk [vmem:[#allocation2 + $0xf8] sm:$0xff] %vm38, 0.0
    $region29: #{gcn_finding_feature.1} parent=1 // pred_fallthru
      _
    %v71 = vld [vmem:[#allocation3] sm:$0xff]
    %v72 = vld [vmem:[#allocation3 + $0x8] sm:$0xff]
    %v73 = vld [vmem:[#allocation3 + $0x10] sm:$0xff]
    %v74 = vld [vmem:[#allocation3 + $0x18] sm:$0xff]
    %v75 = vld [vmem:[#allocation3 + $0x20] sm:$0xff]
    %v76 = vld [vmem:[#allocation3 + $0x28] sm:$0xff]
    %v77 = vld [vmem:[#allocation3 + $0x30] sm:$0xff]
    %v78 = vld [vmem:[#allocation3 + $0x38] sm:$0xff]
    %v79 = vld [vmem:[#allocation3 + $0x40] sm:$0xff]
    %v80 = vld [vmem:[#allocation3 + $0x48] sm:$0xff]
    %v81 = vld [vmem:[#allocation3 + $0x50] sm:$0xff]
    %v82 = vld [vmem:[#allocation3 + $0x58] sm:$0xff]
    %v83 = vld [vmem:[#allocation3 + $0x60] sm:$0xff]
    %v84 = vld [vmem:[#allocation3 + $0x68] sm:$0xff]
    %v85 = vld [vmem:[#allocation3 + $0x70] sm:$0xff]
    %v86 = vld [vmem:[#allocation3 + $0x78] sm:$0xff]
    %v87 = vld [vmem:[#allocation3 + $0x80] sm:$0xff]
    %v88 = vld [vmem:[#allocation3 + $0x88] sm:$0xff]
    %v89 = vld [vmem:[#allocation3 + $0x90] sm:$0xff]
    %v90 = vld [vmem:[#allocation3 + $0x98] sm:$0xff]
    %v91 = vld [vmem:[#allocation3 + $0xa0] sm:$0xff]
    %v92 = vld [vmem:[#allocation3 + $0xa8] sm:$0xff]
    %v93 = vld [vmem:[#allocation3 + $0xb0] sm:$0xff]
    %v94 = vld [vmem:[#allocation3 + $0xb8] sm:$0xff]
    %v95 = vld [vmem:[#allocation3 + $0xc0] sm:$0xff]
    %v96 = vld [vmem:[#allocation3 + $0xc8] sm:$0xff]
    %v97 = vld [vmem:[#allocation3 + $0xd0] sm:$0xff]
    %v98 = vld [vmem:[#allocation3 + $0xd8] sm:$0xff]
    %v99 = vld [vmem:[#allocation3 + $0xe0] sm:$0xff]
    %v100 = vld [vmem:[#allocation3 + $0xe8] sm:$0xff]
    %v101 = vld [vmem:[#allocation3 + $0xf0] sm:$0xff]
    %v102 = vld [vmem:[#allocation3 + $0xf8] sm:$0xff]
    %v103 = vld [vmem:[#allocation3 + $0x100] sm:$0xff]
    %v104 = vld [vmem:[#allocation3 + $0x108] sm:$0xff]
    %v105 = vld [vmem:[#allocation3 + $0x110] sm:$0xff]
    %v106 = vld [vmem:[#allocation3 + $0x118] sm:$0xff]
    %v107 = vld [vmem:[#allocation3 + $0x120] sm:$0xff]
    %v108 = vld [vmem:[#allocation3 + $0x128] sm:$0xff]
    %v109 = vld [vmem:[#allocation3 + $0x130] sm:$0xff]
    %v110 = vld [vmem:[#allocation3 + $0x138] sm:$0xff]
    %v111 = vld [vmem:[#allocation3 + $0x140] sm:$0xff]
    %v112 = vld [vmem:[#allocation3 + $0x148] sm:$0xff]
    %v113 = vld [vmem:[#allocation3 + $0x150] sm:$0xff]
    %v114 = vld [vmem:[#allocation3 + $0x158] sm:$0xff]
    %v115 = vld [vmem:[#allocation3 + $0x160] sm:$0xff]
    %v116 = vld [vmem:[#allocation3 + $0x168] sm:$0xff]
    %v117 = vld [vmem:[#allocation3 + $0x170] sm:$0xff]
    %v118 = vld [vmem:[#allocation3 + $0x178] sm:$0xff]
    %v119 = vld [vmem:[#allocation3 + $0x180] sm:$0xff]
    %v120 = vld [vmem:[#allocation3 + $0x188] sm:$0xff]
    %v121 = vld [vmem:[#allocation3 + $0x190] sm:$0xff]
    %v122 = vld [vmem:[#allocation3 + $0x198] sm:$0xff]
    %v123 = vld [vmem:[#allocation3 + $0x1a0] sm:$0xff]
    %v124 = vld [vmem:[#allocation3 + $0x1a8] sm:$0xff]
    %v125 = vld [vmem:[#allocation3 + $0x1b0] sm:$0xff]
    %v126 = vld [vmem:[#allocation3 + $0x1b8] sm:$0xff]
    %v127 = vld [vmem:[#allocation3 + $0x1c0] sm:$0xff]
    %v128 = vld [vmem:[#allocation3 + $0x1c8] sm:$0xff]
    %v129 = vld [vmem:[#allocation3 + $0x1d0] sm:$0xff]
    %v130 = vld [vmem:[#allocation3 + $0x1d8] sm:$0xff]
    %v131 = vld [vmem:[#allocation3 + $0x1e0] sm:$0xff]
    %v132 = vld [vmem:[#allocation3 + $0x1e8] sm:$0xff]
    %v133 = vld [vmem:[#allocation3 + $0x1f0] sm:$0xff]
    %v134 = vld [vmem:[#allocation3 + $0x1f8] sm:$0xff]
    %v135 = vld [vmem:[%s0] sm:$0xff]
    %v136 = vld [vmem:[%s0 + $0x8] sm:$0xff]
    %v137 = vld [vmem:[%s0 + $0x10] sm:$0xff]
    %v138 = vld [vmem:[%s0 + $0x18] sm:$0xff]
    %v139 = vld [vmem:[%s0 + $0x20] sm:$0xff]
    %v140 = vld [vmem:[%s0 + $0x28] sm:$0xff]
    %v141 = vld [vmem:[%s0 + $0x30] sm:$0xff]
    %v142 = vld [vmem:[%s0 + $0x38] sm:$0xff]
    %v143 = vld [vmem:[%s0 + $0x40] sm:$0xff]
    %v144 = vld [vmem:[%s0 + $0x48] sm:$0xff]
    %v145 = vld [vmem:[%s0 + $0x50] sm:$0xff]
    %v146 = vld [vmem:[%s0 + $0x58] sm:$0xff]
    %v147 = vld [vmem:[%s0 + $0x60] sm:$0xff]
    %v148 = vld [vmem:[%s0 + $0x68] sm:$0xff]
    %v149 = vld [vmem:[%s0 + $0x70] sm:$0xff]
    %v150 = vld [vmem:[%s0 + $0x78] sm:$0xff]
    %v151 = vld [vmem:[%s0 + $0x80] sm:$0xff]
    %v152 = vld [vmem:[%s0 + $0x88] sm:$0xff]
    %v153 = vld [vmem:[%s0 + $0x90] sm:$0xff]
    %v154 = vld [vmem:[%s0 + $0x98] sm:$0xff]
    %v155 = vld [vmem:[%s0 + $0xa0] sm:$0xff]
    %v156 = vld [vmem:[%s0 + $0xa8] sm:$0xff]
    %v157 = vld [vmem:[%s0 + $0xb0] sm:$0xff]
    %v158 = vld [vmem:[%s0 + $0xb8] sm:$0xff]
    %v159 = vld [vmem:[%s0 + $0xc0] sm:$0xff]
    %v160 = vld [vmem:[%s0 + $0xc8] sm:$0xff]
    %v161 = vld [vmem:[%s0 + $0xd0] sm:$0xff]
    %v162 = vld [vmem:[%s0 + $0xd8] sm:$0xff]
    %v163 = vld [vmem:[%s0 + $0xe0] sm:$0xff]
    %v164 = vld [vmem:[%s0 + $0xe8] sm:$0xff]
    %v165 = vld [vmem:[%s0 + $0xf0] sm:$0xff]
    %v166 = vld [vmem:[%s0 + $0xf8] sm:$0xff]
    %v167 = vld [vmem:[#allocation2] sm:$0xff]
    %v168 = vld [vmem:[#allocation2 + $0x8] sm:$0xff]
    %v169 = vld [vmem:[#allocation2 + $0x10] sm:$0xff]
    %v170 = vld [vmem:[#allocation2 + $0x18] sm:$0xff]
    %v171 = vld [vmem:[#allocation2 + $0x20] sm:$0xff]
    %v172 = vld [vmem:[#allocation2 + $0x28] sm:$0xff]
    %v173 = vld [vmem:[#allocation2 + $0x30] sm:$0xff]
    %v174 = vld [vmem:[#allocation2 + $0x38] sm:$0xff]
    %v175 = vld [vmem:[#allocation2 + $0x40] sm:$0xff]
    %v176 = vld [vmem:[#allocation2 + $0x48] sm:$0xff]
    %v177 = vld [vmem:[#allocation2 + $0x50] sm:$0xff]
    %v178 = vld [vmem:[#allocation2 + $0x58] sm:$0xff]
    %v179 = vld [vmem:[#allocation2 + $0x60] sm:$0xff]
    %v180 = vld [vmem:[#allocation2 + $0x68] sm:$0xff]
    %v181 = vld [vmem:[#allocation2 + $0x70] sm:$0xff]
    %v182 = vld [vmem:[#allocation2 + $0x78] sm:$0xff]
    %v183 = vld [vmem:[#allocation2 + $0x80] sm:$0xff]
    %v184 = vld [vmem:[#allocation2 + $0x88] sm:$0xff]
    %v185 = vld [vmem:[#allocation2 + $0x90] sm:$0xff]
    %v186 = vld [vmem:[#allocation2 + $0x98] sm:$0xff]
    %v187 = vld [vmem:[#allocation2 + $0xa0] sm:$0xff]
    %v188 = vld [vmem:[#allocation2 + $0xa8] sm:$0xff]
    %v189 = vld [vmem:[#allocation2 + $0xb0] sm:$0xff]
    %v190 = vld [vmem:[#allocation2 + $0xb8] sm:$0xff]
    %v191 = vld [vmem:[#allocation2 + $0xc0] sm:$0xff]
    %v192 = vld [vmem:[#allocation2 + $0xc8] sm:$0xff]
    %v193 = vld [vmem:[#allocation2 + $0xd0] sm:$0xff]
    %v194 = vld [vmem:[#allocation2 + $0xd8] sm:$0xff]
    %v195 = vld [vmem:[#allocation2 + $0xe0] sm:$0xff]
    %v196 = vld [vmem:[#allocation2 + $0xe8] sm:$0xff]
    %v197 = vld [vmem:[#allocation2 + $0xf0] sm:$0xff]
    %v198 = vld [vmem:[#allocation2 + $0xf8] sm:$0xff]
    %199 = vmatprep.subr.mxu0 0.0
    %200 = vmatpush1.msra.mxu0 %v150
    %201 = vmatprep.subr.mxu0 0.0
    %202 = vmatpush1.msra.mxu0 %v149
    %203 = vmatprep.subr.mxu0 0.0
    %204 = vmatpush1.msra.mxu0 %v148
    %205 = vmatprep.subr.mxu0 0.0
    %206 = vmatpush1.msra.mxu0 %v147
    %207 = vmatprep.subr.mxu0 0.0
    %208 = vmatpush1.msra.mxu0 %v146
    %209 = vmatprep.subr.mxu0 0.0
    %210 = vmatpush1.msra.mxu0 %v145
    %211 = vmatprep.subr.mxu0 0.0
    %212 = vmatpush1.msra.mxu0 %v144
    %213 = vmatprep.subr.mxu0 0.0
    %214 = vmatpush1.msra.mxu0 %v143
    %215 = vmatprep.subr.mxu0 0.0
    %216 = vmatpush1.msra.mxu0 %v142
    %217 = vmatprep.subr.mxu0 0.0
    %218 = vmatpush1.msra.mxu0 %v141
    %219 = vmatprep.subr.mxu0 0.0
    %220 = vmatpush1.msra.mxu0 %v140
    %221 = vmatprep.subr.mxu0 0.0
    %222 = vmatpush1.msra.mxu0 %v139
    %223 = vmatprep.subr.mxu0 0.0
    %224 = vmatpush1.msra.mxu0 %v138
    %225 = vmatprep.subr.mxu0 0.0
    %226 = vmatpush1.msra.mxu0 %v137
    %227 = vmatprep.subr.mxu0 0.0
    %228 = vmatpush1.msra.mxu0 %v136
    %229 = vmatprep.subr.mxu0 0.0
    %230 = vmatpush1.msra.mxu0 %v135
    %231 = vmatprep.subr.mxu0 0.0
    %232 = vmatpush2.msra.mxu0 %v166
    %233 = vmatprep.subr.mxu0 0.0
    %234 = vmatpush2.msra.mxu0 %v165
    %235 = vmatprep.subr.mxu0 0.0
    %236 = vmatpush2.msra.mxu0 %v164
    %237 = vmatprep.subr.mxu0 0.0
    %238 = vmatpush2.msra.mxu0 %v163
    %239 = vmatprep.subr.mxu0 0.0
    %240 = vmatpush2.msra.mxu0 %v162
    %241 = vmatprep.subr.mxu0 0.0
    %242 = vmatpush2.msra.mxu0 %v161
    %243 = vmatprep.subr.mxu0 0.0
    %244 = vmatpush2.msra.mxu0 %v160
    %245 = vmatprep.subr.mxu0 0.0
    %246 = vmatpush2.msra.mxu0 %v159
    %247 = vmatprep.subr.mxu0 0.0
    %248 = vmatpush2.msra.mxu0 %v158
    %249 = vmatprep.subr.mxu0 0.0
    %250 = vmatpush2.msra.mxu0 %v157
    %251 = vmatprep.subr.mxu0 0.0
    %252 = vmatpush2.msra.mxu0 %v156
    %253 = vmatprep.subr.mxu0 0.0
    %254 = vmatpush2.msra.mxu0 %v155
    %255 = vmatprep.subr.mxu0 0.0
    %256 = vmatpush2.msra.mxu0 %v154
    %257 = vmatprep.subr.mxu0 0.0
    %258 = vmatpush2.msra.mxu0 %v153
    %259 = vmatprep.subr.mxu0 0.0
    %260 = vmatpush2.msra.mxu0 %v152
    %261 = vmatprep.subr.mxu0 0.0
    %262 = vmatpush2.msra.mxu0 %v151
    %263 = vmatprep.mubr.f32.mxu0 %v72
    %264 = vmatmul.mubr.f32.gmra.mxu0 %v71
    %v265 = vpop.f32.mrf.mxu0
    %v266 = vadd.f32 0.0, %v265
    %v267 = vpop.f32.mrf.mxu0
    %268 = vmatprep.mubr.f32.mxu0 %v74
    %269 = vmatmul.mubr.f32.gmra.mxu0 %v73
    %v270 = vpop.f32.mrf.mxu0
    %v271 = vadd.f32 0.0, %v270
    %v272 = vpop.f32.mrf.mxu0
    %273 = vmatprep.mubr.f32.mxu0 %v76
    %274 = vmatmul.mubr.f32.gmra.mxu0 %v75
    %v275 = vpop.f32.mrf.mxu0
    %v276 = vadd.f32 0.0, %v275
    %v277 = vpop.f32.mrf.mxu0
    %278 = vmatprep.mubr.f32.mxu0 %v78
    %279 = vmatmul.mubr.f32.gmra.mxu0 %v77
    %v280 = vpop.f32.mrf.mxu0
    %v281 = vadd.f32 0.0, %v280
    %v282 = vpop.f32.mrf.mxu0
    %283 = vmatprep.mubr.f32.mxu0 %v80
    %284 = vmatmul.mubr.f32.gmra.mxu0 %v79
    %v285 = vpop.f32.mrf.mxu0
    %v286 = vadd.f32 0.0, %v285
    %v287 = vpop.f32.mrf.mxu0
    %288 = vmatprep.mubr.f32.mxu0 %v82
    %289 = vmatmul.mubr.f32.gmra.mxu0 %v81
    %v290 = vpop.f32.mrf.mxu0
    %v291 = vadd.f32 0.0, %v290
    %v292 = vpop.f32.mrf.mxu0
    %293 = vmatprep.mubr.f32.mxu0 %v84
    %294 = vmatmul.mubr.f32.gmra.mxu0 %v83
    %v295 = vpop.f32.mrf.mxu0
    %v296 = vadd.f32 0.0, %v295
    %v297 = vpop.f32.mrf.mxu0
    %298 = vmatprep.mubr.f32.mxu0 %v86
    %299 = vmatmul.mubr.f32.gmra.mxu0 %v85
    %v300 = vpop.f32.mrf.mxu0
    %v301 = vadd.f32 0.0, %v300
    %v302 = vpop.f32.mrf.mxu0
    %303 = vmatprep.mubr.f32.mxu0 %v88
    %304 = vmatmul.mubr.f32.gmra.mxu0 %v87
    %v305 = vpop.f32.mrf.mxu0
    %v306 = vadd.f32 0.0, %v305
    %v307 = vpop.f32.mrf.mxu0
    %308 = vmatprep.mubr.f32.mxu0 %v90
    %309 = vmatmul.mubr.f32.gmra.mxu0 %v89
    %v310 = vpop.f32.mrf.mxu0
    %v311 = vadd.f32 0.0, %v310
    %v312 = vpop.f32.mrf.mxu0
    %313 = vmatprep.mubr.f32.mxu0 %v92
    %314 = vmatmul.mubr.f32.gmra.mxu0 %v91
    %v315 = vpop.f32.mrf.mxu0
    %v316 = vadd.f32 0.0, %v315
    %v317 = vpop.f32.mrf.mxu0
    %318 = vmatprep.mubr.f32.mxu0 %v94
    %319 = vmatmul.mubr.f32.gmra.mxu0 %v93
    %v320 = vpop.f32.mrf.mxu0
    %v321 = vadd.f32 0.0, %v320
    %v322 = vpop.f32.mrf.mxu0
    %323 = vmatprep.mubr.f32.mxu0 %v96
    %324 = vmatmul.mubr.f32.gmra.mxu0 %v95
    %v325 = vpop.f32.mrf.mxu0
    %v326 = vadd.f32 0.0, %v325
    %v327 = vpop.f32.mrf.mxu0
    %328 = vmatprep.mubr.f32.mxu0 %v98
    %329 = vmatmul.mubr.f32.gmra.mxu0 %v97
    %v330 = vpop.f32.mrf.mxu0
    %v331 = vadd.f32 0.0, %v330
    %v332 = vpop.f32.mrf.mxu0
    %333 = vmatprep.mubr.f32.mxu0 %v100
    %334 = vmatmul.mubr.f32.gmra.mxu0 %v99
    %v335 = vpop.f32.mrf.mxu0
    %v336 = vadd.f32 0.0, %v335
    %v337 = vpop.f32.mrf.mxu0
    %338 = vmatprep.mubr.f32.mxu0 %v102
    %339 = vmatmul.mubr.f32.gmra.mxu0 %v101
    %v340 = vpop.f32.mrf.mxu0
    %v341 = vadd.f32 0.0, %v340
    %v342 = vpop.f32.mrf.mxu0
    %343 = vmatprep.mubr.f32.mxu0 %v104
    %344 = vmatmul.mubr.f32.gmra.mxu0 %v103
    %v345 = vpop.f32.mrf.mxu0
    %v346 = vadd.f32 0.0, %v345
    %v347 = vpop.f32.mrf.mxu0
    %348 = vmatprep.mubr.f32.mxu0 %v106
    %349 = vmatmul.mubr.f32.gmra.mxu0 %v105
    %v350 = vpop.f32.mrf.mxu0
    %v351 = vadd.f32 0.0, %v350
    %v352 = vpop.f32.mrf.mxu0
    %353 = vmatprep.mubr.f32.mxu0 %v108
    %354 = vmatmul.mubr.f32.gmra.mxu0 %v107
    %v355 = vpop.f32.mrf.mxu0
    %v356 = vadd.f32 0.0, %v355
    %v357 = vpop.f32.mrf.mxu0
    %358 = vmatprep.mubr.f32.mxu0 %v110
    %359 = vmatmul.mubr.f32.gmra.mxu0 %v109
    %v360 = vpop.f32.mrf.mxu0
    %v361 = vadd.f32 0.0, %v360
    %v362 = vpop.f32.mrf.mxu0
    %363 = vmatprep.mubr.f32.mxu0 %v112
    %364 = vmatmul.mubr.f32.gmra.mxu0 %v111
    %v365 = vpop.f32.mrf.mxu0
    %v366 = vadd.f32 0.0, %v365
    %v367 = vpop.f32.mrf.mxu0
    %368 = vmatprep.mubr.f32.mxu0 %v114
    %369 = vmatmul.mubr.f32.gmra.mxu0 %v113
    %v370 = vpop.f32.mrf.mxu0
    %v371 = vadd.f32 0.0, %v370
    %v372 = vpop.f32.mrf.mxu0
    %373 = vmatprep.mubr.f32.mxu0 %v116
    %374 = vmatmul.mubr.f32.gmra.mxu0 %v115
    %v375 = vpop.f32.mrf.mxu0
    %v376 = vadd.f32 0.0, %v375
    %v377 = vpop.f32.mrf.mxu0
    %378 = vmatprep.mubr.f32.mxu0 %v118
    %379 = vmatmul.mubr.f32.gmra.mxu0 %v117
    %v380 = vpop.f32.mrf.mxu0
    %v381 = vadd.f32 0.0, %v380
    %v382 = vpop.f32.mrf.mxu0
    %383 = vmatprep.mubr.f32.mxu0 %v120
    %384 = vmatmul.mubr.f32.gmra.mxu0 %v119
    %v385 = vpop.f32.mrf.mxu0
    %v386 = vadd.f32 0.0, %v385
    %v387 = vpop.f32.mrf.mxu0
    %388 = vmatprep.mubr.f32.mxu0 %v122
    %389 = vmatmul.mubr.f32.gmra.mxu0 %v121
    %v390 = vpop.f32.mrf.mxu0
    %v391 = vadd.f32 0.0, %v390
    %v392 = vpop.f32.mrf.mxu0
    %393 = vmatprep.mubr.f32.mxu0 %v124
    %394 = vmatmul.mubr.f32.gmra.mxu0 %v123
    %v395 = vpop.f32.mrf.mxu0
    %v396 = vadd.f32 0.0, %v395
    %v397 = vpop.f32.mrf.mxu0
    %398 = vmatprep.mubr.f32.mxu0 %v126
    %399 = vmatmul.mubr.f32.gmra.mxu0 %v125
    %v400 = vpop.f32.mrf.mxu0
    %v401 = vadd.f32 0.0, %v400
    %v402 = vpop.f32.mrf.mxu0
    %403 = vmatprep.mubr.f32.mxu0 %v128
    %404 = vmatmul.mubr.f32.gmra.mxu0 %v127
    %v405 = vpop.f32.mrf.mxu0
    %v406 = vadd.f32 0.0, %v405
    %v407 = vpop.f32.mrf.mxu0
    %408 = vmatprep.mubr.f32.mxu0 %v130
    %409 = vmatmul.mubr.f32.gmra.mxu0 %v129
    %v410 = vpop.f32.mrf.mxu0
    %v411 = vadd.f32 0.0, %v410
    %v412 = vpop.f32.mrf.mxu0
    %413 = vmatprep.mubr.f32.mxu0 %v132
    %414 = vmatmul.mubr.f32.gmra.mxu0 %v131
    %v415 = vpop.f32.mrf.mxu0
    %v416 = vadd.f32 0.0, %v415
    %v417 = vpop.f32.mrf.mxu0
    %418 = vmatprep.mubr.f32.mxu0 %v134
    %419 = vmatmul.mubr.f32.gmra.mxu0 %v133
    %v420 = vpop.f32.mrf.mxu0
    %v421 = vadd.f32 0.0, %v420
    %v422 = vpop.f32.mrf.mxu0
    %423 = vdwg.mxu0
    %v424 = vadd.f32 %v167, %v266
    %v425 = vadd.f32 %v168, %v271
    %v426 = vadd.f32 %v169, %v276
    %v427 = vadd.f32 %v170, %v281
    %v428 = vadd.f32 %v171, %v286
    %v429 = vadd.f32 %v172, %v291
    %v430 = vadd.f32 %v173, %v296
    %v431 = vadd.f32 %v174, %v301
    %v432 = vadd.f32 %v175, %v306
    %v433 = vadd.f32 %v176, %v311
    %v434 = vadd.f32 %v177, %v316
    %v435 = vadd.f32 %v178, %v321
    %v436 = vadd.f32 %v179, %v326
    %v437 = vadd.f32 %v180, %v331
    %v438 = vadd.f32 %v181, %v336
    %v439 = vadd.f32 %v182, %v341
    %v440 = vadd.f32 %v183, %v346
    %v441 = vadd.f32 %v184, %v351
    %v442 = vadd.f32 %v185, %v356
    %v443 = vadd.f32 %v186, %v361
    %v444 = vadd.f32 %v187, %v366
    %v445 = vadd.f32 %v188, %v371
    %v446 = vadd.f32 %v189, %v376
    %v447 = vadd.f32 %v190, %v381
    %v448 = vadd.f32 %v191, %v386
    %v449 = vadd.f32 %v192, %v391
    %v450 = vadd.f32 %v193, %v396
    %v451 = vadd.f32 %v194, %v401
    %v452 = vadd.f32 %v195, %v406
    %v453 = vadd.f32 %v196, %v411
    %v454 = vadd.f32 %v197, %v416
    %v455 = vadd.f32 %v198, %v421
    %vm456 = vcmask 261120
    %457 = vst.msk [vmem:[#allocation2] sm:$0xff] %vm456, %v424
    %458 = vst.msk [vmem:[#allocation2 + $0x8] sm:$0xff] %vm456, %v425
    %459 = vst.msk [vmem:[#allocation2 + $0x10] sm:$0xff] %vm456, %v426
    %460 = vst.msk [vmem:[#allocation2 + $0x18] sm:$0xff] %vm456, %v427
    %461 = vst.msk [vmem:[#allocation2 + $0x20] sm:$0xff] %vm456, %v428
    %462 = vst.msk [vmem:[#allocation2 + $0x28] sm:$0xff] %vm456, %v429
    %463 = vst.msk [vmem:[#allocation2 + $0x30] sm:$0xff] %vm456, %v430
    %464 = vst.msk [vmem:[#allocation2 + $0x38] sm:$0xff] %vm456, %v431
    %465 = vst.msk [vmem:[#allocation2 + $0x40] sm:$0xff] %vm456, %v432
    %466 = vst.msk [vmem:[#allocation2 + $0x48] sm:$0xff] %vm456, %v433
    %467 = vst.msk [vmem:[#allocation2 + $0x50] sm:$0xff] %vm456, %v434
    %468 = vst.msk [vmem:[#allocation2 + $0x58] sm:$0xff] %vm456, %v435
    %469 = vst.msk [vmem:[#allocation2 + $0x60] sm:$0xff] %vm456, %v436
    %470 = vst.msk [vmem:[#allocation2 + $0x68] sm:$0xff] %vm456, %v437
    %471 = vst.msk [vmem:[#allocation2 + $0x70] sm:$0xff] %vm456, %v438
    %472 = vst.msk [vmem:[#allocation2 + $0x78] sm:$0xff] %vm456, %v439
    %473 = vst.msk [vmem:[#allocation2 + $0x80] sm:$0xff] %vm456, %v440
    %474 = vst.msk [vmem:[#allocation2 + $0x88] sm:$0xff] %vm456, %v441
    %475 = vst.msk [vmem:[#allocation2 + $0x90] sm:$0xff] %vm456, %v442
    %476 = vst.msk [vmem:[#allocation2 + $0x98] sm:$0xff] %vm456, %v443
    %477 = vst.msk [vmem:[#allocation2 + $0xa0] sm:$0xff] %vm456, %v444
    %478 = vst.msk [vmem:[#allocation2 + $0xa8] sm:$0xff] %vm456, %v445
    %479 = vst.msk [vmem:[#allocation2 + $0xb0] sm:$0xff] %vm456, %v446
    %480 = vst.msk [vmem:[#allocation2 + $0xb8] sm:$0xff] %vm456, %v447
    %481 = vst.msk [vmem:[#allocation2 + $0xc0] sm:$0xff] %vm456, %v448
    %482 = vst.msk [vmem:[#allocation2 + $0xc8] sm:$0xff] %vm456, %v449
    %483 = vst.msk [vmem:[#allocation2 + $0xd0] sm:$0xff] %vm456, %v450
    %484 = vst.msk [vmem:[#allocation2 + $0xd8] sm:$0xff] %vm456, %v451
    %485 = vst.msk [vmem:[#allocation2 + $0xe0] sm:$0xff] %vm456, %v452
    %486 = vst.msk [vmem:[#allocation2 + $0xe8] sm:$0xff] %vm456, %v453
    %487 = vst.msk [vmem:[#allocation2 + $0xf0] sm:$0xff] %vm456, %v454
    %488 = vst.msk [vmem:[#allocation2 + $0xf8] sm:$0xff] %vm456, %v455
    // Predicated region
    $region30: #{gcn_finding_feature.1} parent=1 // pred_check
      %p489 = pneg %p34
    $region31: #{gcn_finding_feature.1} parent=1 // pred_check_branch
      %491 = sbr.rel (%p489) target = $region33
    $region32: #{gcn_finding_feature.1} parent=1 // pred_region
      %v492 = vld [vmem:[#allocation2] sm:$0xff]
      %v493 = vld [vmem:[#allocation2 + $0x8] sm:$0xff]
      %v494 = vld [vmem:[#allocation2 + $0x10] sm:$0xff]
      %v495 = vld [vmem:[#allocation2 + $0x18] sm:$0xff]
      %v496 = vld [vmem:[#allocation2 + $0x20] sm:$0xff]
      %v497 = vld [vmem:[#allocation2 + $0x28] sm:$0xff]
      %v498 = vld [vmem:[#allocation2 + $0x30] sm:$0xff]
      %v499 = vld [vmem:[#allocation2 + $0x38] sm:$0xff]
      %v500 = vld [vmem:[#allocation2 + $0x40] sm:$0xff]
      %v501 = vld [vmem:[#allocation2 + $0x48] sm:$0xff]
      %v502 = vld [vmem:[#allocation2 + $0x50] sm:$0xff]
      %v503 = vld [vmem:[#allocation2 + $0x58] sm:$0xff]
      %v504 = vld [vmem:[#allocation2 + $0x60] sm:$0xff]
      %v505 = vld [vmem:[#allocation2 + $0x68] sm:$0xff]
      %v506 = vld [vmem:[#allocation2 + $0x70] sm:$0xff]
      %v507 = vld [vmem:[#allocation2 + $0x78] sm:$0xff]
      %v508 = vld [vmem:[#allocation2 + $0x80] sm:$0xff]
      %v509 = vld [vmem:[#allocation2 + $0x88] sm:$0xff]
      %v510 = vld [vmem:[#allocation2 + $0x90] sm:$0xff]
      %v511 = vld [vmem:[#allocation2 + $0x98] sm:$0xff]
      %v512 = vld [vmem:[#allocation2 + $0xa0] sm:$0xff]
      %v513 = vld [vmem:[#allocation2 + $0xa8] sm:$0xff]
      %v514 = vld [vmem:[#allocation2 + $0xb0] sm:$0xff]
      %v515 = vld [vmem:[#allocation2 + $0xb8] sm:$0xff]
      %v516 = vld [vmem:[#allocation2 + $0xc0] sm:$0xff]
      %v517 = vld [vmem:[#allocation2 + $0xc8] sm:$0xff]
      %v518 = vld [vmem:[#allocation2 + $0xd0] sm:$0xff]
      %v519 = vld [vmem:[#allocation2 + $0xd8] sm:$0xff]
      %v520 = vld [vmem:[#allocation2 + $0xe0] sm:$0xff]
      %v521 = vld [vmem:[#allocation2 + $0xe8] sm:$0xff]
      %v522 = vld [vmem:[#allocation2 + $0xf0] sm:$0xff]
      %v523 = vld [vmem:[#allocation2 + $0xf8] sm:$0xff]
      %v524 = vld [vmem:[%s2] sm:$0x1]
      %v526 = vlaneseq
      %v527 = vshrl.u32 %v526, 7
      %v528 = vsub.s32 0, %v527
      %v529 = vrot.slane %v524, %v528
      %v531 = vadd.f32 %v492, %v529
      %v532 = vadd.f32 %v493, %v529
      %v533 = vadd.f32 %v494, %v529
      %v534 = vadd.f32 %v495, %v529
      %v535 = vadd.f32 %v496, %v529
      %v536 = vadd.f32 %v497, %v529
      %v537 = vadd.f32 %v498, %v529
      %v538 = vadd.f32 %v499, %v529
      %v539 = vadd.f32 %v500, %v529
      %v540 = vadd.f32 %v501, %v529
      %v541 = vadd.f32 %v502, %v529
      %v542 = vadd.f32 %v503, %v529
      %v543 = vadd.f32 %v504, %v529
      %v544 = vadd.f32 %v505, %v529
      %v545 = vadd.f32 %v506, %v529
      %v546 = vadd.f32 %v507, %v529
      %v547 = vadd.f32 %v508, %v529
      %v548 = vadd.f32 %v509, %v529
      %v549 = vadd.f32 %v510, %v529
      %v550 = vadd.f32 %v511, %v529
      %v551 = vadd.f32 %v512, %v529
      %v552 = vadd.f32 %v513, %v529
      %v553 = vadd.f32 %v514, %v529
      %v554 = vadd.f32 %v515, %v529
      %v555 = vadd.f32 %v516, %v529
      %v556 = vadd.f32 %v517, %v529
      %v557 = vadd.f32 %v518, %v529
      %v558 = vadd.f32 %v519, %v529
      %v559 = vadd.f32 %v520, %v529
      %v560 = vadd.f32 %v521, %v529
      %v561 = vadd.f32 %v522, %v529
      %v562 = vadd.f32 %v523, %v529
      %v563 = vmax.f32 %v531, 0.0
      %v564 = vmax.f32 %v532, 0.0
      %v565 = vmax.f32 %v533, 0.0
      %v566 = vmax.f32 %v534, 0.0
      %v567 = vmax.f32 %v535, 0.0
      %v568 = vmax.f32 %v536, 0.0
      %v569 = vmax.f32 %v537, 0.0
      %v570 = vmax.f32 %v538, 0.0
      %v571 = vmax.f32 %v539, 0.0
      %v572 = vmax.f32 %v540, 0.0
      %v573 = vmax.f32 %v541, 0.0
      %v574 = vmax.f32 %v542, 0.0
      %v575 = vmax.f32 %v543, 0.0
      %v576 = vmax.f32 %v544, 0.0
      %v577 = vmax.f32 %v545, 0.0
      %v578 = vmax.f32 %v546, 0.0
      %v579 = vmax.f32 %v547, 0.0
      %v580 = vmax.f32 %v548, 0.0
      %v581 = vmax.f32 %v549, 0.0
      %v582 = vmax.f32 %v550, 0.0
      %v583 = vmax.f32 %v551, 0.0
      %v584 = vmax.f32 %v552, 0.0
      %v585 = vmax.f32 %v553, 0.0
      %v586 = vmax.f32 %v554, 0.0
      %v587 = vmax.f32 %v555, 0.0
      %v588 = vmax.f32 %v556, 0.0
      %v589 = vmax.f32 %v557, 0.0
      %v590 = vmax.f32 %v558, 0.0
      %v591 = vmax.f32 %v559, 0.0
      %v592 = vmax.f32 %v560, 0.0
      %v593 = vmax.f32 %v561, 0.0
      %v594 = vmax.f32 %v562, 0.0
      %v595 = vld [vmem:[%s3] sm:$0xff]
      %v596 = vld [vmem:[%s3 + $0x8] sm:$0xff]
      %v597 = vld [vmem:[%s4] sm:$0x1]
      %v599 = vlaneseq
      %v600 = vshrl.u32 %v599, 7
      %v601 = vsub.s32 0, %v600
      %v602 = vrot.slane %v597, %v601
      %v605 = vsel %vm456, %v563, 0
      %v608 = vsel %vm456, %v564, 0
      %v611 = vsel %vm456, %v565, 0
      %v614 = vsel %vm456, %v566, 0
      %v617 = vsel %vm456, %v567, 0
      %v620 = vsel %vm456, %v568, 0
      %v623 = vsel %vm456, %v569, 0
      %v626 = vsel %vm456, %v570, 0
      %v629 = vsel %vm456, %v571, 0
      %v632 = vsel %vm456, %v572, 0
      %v635 = vsel %vm456, %v573, 0
      %v638 = vsel %vm456, %v574, 0
      %v641 = vsel %vm456, %v575, 0
      %v644 = vsel %vm456, %v576, 0
      %v647 = vsel %vm456, %v577, 0
      %v650 = vsel %vm456, %v578, 0
      %v653 = vsel %vm456, %v579, 0
      %v656 = vsel %vm456, %v580, 0
      %v659 = vsel %vm456, %v581, 0
      %v662 = vsel %vm456, %v582, 0
      %v665 = vsel %vm456, %v583, 0
      %v668 = vsel %vm456, %v584, 0
      %v671 = vsel %vm456, %v585, 0
      %v674 = vsel %vm456, %v586, 0
      %v677 = vsel %vm456, %v587, 0
      %v680 = vsel %vm456, %v588, 0
      %v683 = vsel %vm456, %v589, 0
      %v686 = vsel %vm456, %v590, 0
      %v689 = vsel %vm456, %v591, 0
      %v692 = vsel %vm456, %v592, 0
      %v695 = vsel %vm456, %v593, 0
      %v698 = vsel %vm456, %v594, 0
      %v701 = vsel %vm456, %v595, 0
      %v704 = vsel %vm456, %v596, 0
      %706 = vmatprep.subr.mxu0 0.0
      %707 = vmatpush1.xpose.msra.mxu0 0.0
      %708 = vmatprep.subr.mxu0 0.0
      %709 = vmatpush1.xpose.msra.mxu0 0.0
      %710 = vmatprep.subr.mxu0 0.0
      %711 = vmatpush1.xpose.msra.mxu0 0.0
      %712 = vmatprep.subr.mxu0 0.0
      %713 = vmatpush1.xpose.msra.mxu0 0.0
      %714 = vmatprep.subr.mxu0 0.0
      %715 = vmatpush1.xpose.msra.mxu0 0.0
      %716 = vmatprep.subr.mxu0 0.0
      %717 = vmatpush1.xpose.msra.mxu0 0.0
      %718 = vmatprep.subr.mxu0 0.0
      %719 = vmatpush1.xpose.msra.mxu0 0.0
      %720 = vmatprep.subr.mxu0 0.0
      %721 = vmatpush1.xpose.msra.mxu0 0.0
      %722 = vmatprep.subr.mxu0 0.0
      %723 = vmatpush1.xpose.msra.mxu0 0.0
      %724 = vmatprep.subr.mxu0 0.0
      %725 = vmatpush1.xpose.msra.mxu0 0.0
      %726 = vmatprep.subr.mxu0 0.0
      %727 = vmatpush1.xpose.msra.mxu0 0.0
      %728 = vmatprep.subr.mxu0 0.0
      %729 = vmatpush1.xpose.msra.mxu0 0.0
      %730 = vmatprep.subr.mxu0 0.0
      %731 = vmatpush1.xpose.msra.mxu0 0.0
      %732 = vmatprep.subr.mxu0 0.0
      %733 = vmatpush1.xpose.msra.mxu0 0.0
      %734 = vmatprep.subr.mxu0 0.0
      %735 = vmatpush1.xpose.msra.mxu0 %v704
      %736 = vmatprep.subr.mxu0 0.0
      %737 = vmatpush1.xpose.msra.mxu0 %v701
      %738 = vmatprep.subr.mxu0 0.0
      %739 = vmatpush2.xpose.msra.mxu0 0.0
      %740 = vmatprep.subr.mxu0 0.0
      %741 = vmatpush2.xpose.msra.mxu0 0.0
      %742 = vmatprep.subr.mxu0 0.0
      %743 = vmatpush2.xpose.msra.mxu0 0.0
      %744 = vmatprep.subr.mxu0 0.0
      %745 = vmatpush2.xpose.msra.mxu0 0.0
      %746 = vmatprep.subr.mxu0 0.0
      %747 = vmatpush2.xpose.msra.mxu0 0.0
      %748 = vmatprep.subr.mxu0 0.0
      %749 = vmatpush2.xpose.msra.mxu0 0.0
      %750 = vmatprep.subr.mxu0 0.0
      %751 = vmatpush2.xpose.msra.mxu0 0.0
      %752 = vmatprep.subr.mxu0 0.0
      %753 = vmatpush2.xpose.msra.mxu0 0.0
      %754 = vmatprep.subr.mxu0 0.0
      %755 = vmatpush2.xpose.msra.mxu0 0.0
      %756 = vmatprep.subr.mxu0 0.0
      %757 = vmatpush2.xpose.msra.mxu0 0.0
      %758 = vmatprep.subr.mxu0 0.0
      %759 = vmatpush2.xpose.msra.mxu0 0.0
      %760 = vmatprep.subr.mxu0 0.0
      %761 = vmatpush2.xpose.msra.mxu0 0.0
      %762 = vmatprep.subr.mxu0 0.0
      %763 = vmatpush2.xpose.msra.mxu0 0.0
      %764 = vmatprep.subr.mxu0 0.0
      %765 = vmatpush2.xpose.msra.mxu0 0.0
      %766 = vmatprep.subr.mxu0 0.0
      %767 = vmatpush2.xpose.msra.mxu0 0.0
      %768 = vmatprep.subr.mxu0 0.0
      %769 = vmatpush2.xpose.msra.mxu0 0.0
      %770 = vmatprep.mubr.f32.mxu0 0.0
      %771 = vmatmul.mubr.f32.gmra.mxu0 %v605
      %v772 = vpop.f32.mrf.mxu0
      %v773 = vadd.f32 %v602, %v772
      %v774 = vpop.f32.mrf.mxu0
      %775 = vmatprep.mubr.f32.mxu0 0.0
      %776 = vmatmul.mubr.f32.gmra.mxu0 %v608
      %v777 = vpop.f32.mrf.mxu0
      %v778 = vadd.f32 %v602, %v777
      %v779 = vpop.f32.mrf.mxu0
      %780 = vmatprep.mubr.f32.mxu0 0.0
      %781 = vmatmul.mubr.f32.gmra.mxu0 %v611
      %v782 = vpop.f32.mrf.mxu0
      %v783 = vadd.f32 %v602, %v782
      %v784 = vpop.f32.mrf.mxu0
      %785 = vmatprep.mubr.f32.mxu0 0.0
      %786 = vmatmul.mubr.f32.gmra.mxu0 %v614
      %v787 = vpop.f32.mrf.mxu0
      %v788 = vadd.f32 %v602, %v787
      %v789 = vpop.f32.mrf.mxu0
      %790 = vmatprep.mubr.f32.mxu0 0.0
      %791 = vmatmul.mubr.f32.gmra.mxu0 %v617
      %v792 = vpop.f32.mrf.mxu0
      %v793 = vadd.f32 %v602, %v792
      %v794 = vpop.f32.mrf.mxu0
      %795 = vmatprep.mubr.f32.mxu0 0.0
      %796 = vmatmul.mubr.f32.gmra.mxu0 %v620
      %v797 = vpop.f32.mrf.mxu0
      %v798 = vadd.f32 %v602, %v797
      %v799 = vpop.f32.mrf.mxu0
      %800 = vmatprep.mubr.f32.mxu0 0.0
      %801 = vmatmul.mubr.f32.gmra.mxu0 %v623
      %v802 = vpop.f32.mrf.mxu0
      %v803 = vadd.f32 %v602, %v802
      %v804 = vpop.f32.mrf.mxu0
      %805 = vmatprep.mubr.f32.mxu0 0.0
      %806 = vmatmul.mubr.f32.gmra.mxu0 %v626
      %v807 = vpop.f32.mrf.mxu0
      %v808 = vadd.f32 %v602, %v807
      %v809 = vpop.f32.mrf.mxu0
      %810 = vmatprep.mubr.f32.mxu0 0.0
      %811 = vmatmul.mubr.f32.gmra.mxu0 %v629
      %v812 = vpop.f32.mrf.mxu0
      %v813 = vadd.f32 %v602, %v812
      %v814 = vpop.f32.mrf.mxu0
      %815 = vmatprep.mubr.f32.mxu0 0.0
      %816 = vmatmul.mubr.f32.gmra.mxu0 %v632
      %v817 = vpop.f32.mrf.mxu0
      %v818 = vadd.f32 %v602, %v817
      %v819 = vpop.f32.mrf.mxu0
      %820 = vmatprep.mubr.f32.mxu0 0.0
      %821 = vmatmul.mubr.f32.gmra.mxu0 %v635
      %v822 = vpop.f32.mrf.mxu0
      %v823 = vadd.f32 %v602, %v822
      %v824 = vpop.f32.mrf.mxu0
      %825 = vmatprep.mubr.f32.mxu0 0.0
      %826 = vmatmul.mubr.f32.gmra.mxu0 %v638
      %v827 = vpop.f32.mrf.mxu0
      %v828 = vadd.f32 %v602, %v827
      %v829 = vpop.f32.mrf.mxu0
      %830 = vmatprep.mubr.f32.mxu0 0.0
      %831 = vmatmul.mubr.f32.gmra.mxu0 %v641
      %v832 = vpop.f32.mrf.mxu0
      %v833 = vadd.f32 %v602, %v832
      %v834 = vpop.f32.mrf.mxu0
      %835 = vmatprep.mubr.f32.mxu0 0.0
      %836 = vmatmul.mubr.f32.gmra.mxu0 %v644
      %v837 = vpop.f32.mrf.mxu0
      %v838 = vadd.f32 %v602, %v837
      %v839 = vpop.f32.mrf.mxu0
      %840 = vmatprep.mubr.f32.mxu0 0.0
      %841 = vmatmul.mubr.f32.gmra.mxu0 %v647
      %v842 = vpop.f32.mrf.mxu0
      %v843 = vadd.f32 %v602, %v842
      %v844 = vpop.f32.mrf.mxu0
      %845 = vmatprep.mubr.f32.mxu0 0.0
      %846 = vmatmul.mubr.f32.gmra.mxu0 %v650
      %v847 = vpop.f32.mrf.mxu0
      %v848 = vadd.f32 %v602, %v847
      %v849 = vpop.f32.mrf.mxu0
      %850 = vmatprep.mubr.f32.mxu0 0.0
      %851 = vmatmul.mubr.f32.gmra.mxu0 %v653
      %v852 = vpop.f32.mrf.mxu0
      %v853 = vadd.f32 %v602, %v852
      %v854 = vpop.f32.mrf.mxu0
      %855 = vmatprep.mubr.f32.mxu0 0.0
      %856 = vmatmul.mubr.f32.gmra.mxu0 %v656
      %v857 = vpop.f32.mrf.mxu0
      %v858 = vadd.f32 %v602, %v857
      %v859 = vpop.f32.mrf.mxu0
      %860 = vmatprep.mubr.f32.mxu0 0.0
      %861 = vmatmul.mubr.f32.gmra.mxu0 %v659
      %v862 = vpop.f32.mrf.mxu0
      %v863 = vadd.f32 %v602, %v862
      %v864 = vpop.f32.mrf.mxu0
      %865 = vmatprep.mubr.f32.mxu0 0.0
      %866 = vmatmul.mubr.f32.gmra.mxu0 %v662
      %v867 = vpop.f32.mrf.mxu0
      %v868 = vadd.f32 %v602, %v867
      %v869 = vpop.f32.mrf.mxu0
      %870 = vmatprep.mubr.f32.mxu0 0.0
      %871 = vmatmul.mubr.f32.gmra.mxu0 %v665
      %v872 = vpop.f32.mrf.mxu0
      %v873 = vadd.f32 %v602, %v872
      %v874 = vpop.f32.mrf.mxu0
      %875 = vmatprep.mubr.f32.mxu0 0.0
      %876 = vmatmul.mubr.f32.gmra.mxu0 %v668
      %v877 = vpop.f32.mrf.mxu0
      %v878 = vadd.f32 %v602, %v877
      %v879 = vpop.f32.mrf.mxu0
      %880 = vmatprep.mubr.f32.mxu0 0.0
      %881 = vmatmul.mubr.f32.gmra.mxu0 %v671
      %v882 = vpop.f32.mrf.mxu0
      %v883 = vadd.f32 %v602, %v882
      %v884 = vpop.f32.mrf.mxu0
      %885 = vmatprep.mubr.f32.mxu0 0.0
      %886 = vmatmul.mubr.f32.gmra.mxu0 %v674
      %v887 = vpop.f32.mrf.mxu0
      %v888 = vadd.f32 %v602, %v887
      %v889 = vpop.f32.mrf.mxu0
      %890 = vmatprep.mubr.f32.mxu0 0.0
      %891 = vmatmul.mubr.f32.gmra.mxu0 %v677
      %v892 = vpop.f32.mrf.mxu0
      %v893 = vadd.f32 %v602, %v892
      %v894 = vpop.f32.mrf.mxu0
      %895 = vmatprep.mubr.f32.mxu0 0.0
      %896 = vmatmul.mubr.f32.gmra.mxu0 %v680
      %v897 = vpop.f32.mrf.mxu0
      %v898 = vadd.f32 %v602, %v897
      %v899 = vpop.f32.mrf.mxu0
      %900 = vmatprep.mubr.f32.mxu0 0.0
      %901 = vmatmul.mubr.f32.gmra.mxu0 %v683
      %v902 = vpop.f32.mrf.mxu0
      %v903 = vadd.f32 %v602, %v902
      %v904 = vpop.f32.mrf.mxu0
      %905 = vmatprep.mubr.f32.mxu0 0.0
      %906 = vmatmul.mubr.f32.gmra.mxu0 %v686
      %v907 = vpop.f32.mrf.mxu0
      %v908 = vadd.f32 %v602, %v907
      %v909 = vpop.f32.mrf.mxu0
      %910 = vmatprep.mubr.f32.mxu0 0.0
      %911 = vmatmul.mubr.f32.gmra.mxu0 %v689
      %v912 = vpop.f32.mrf.mxu0
      %v913 = vadd.f32 %v602, %v912
      %v914 = vpop.f32.mrf.mxu0
      %915 = vmatprep.mubr.f32.mxu0 0.0
      %916 = vmatmul.mubr.f32.gmra.mxu0 %v692
      %v917 = vpop.f32.mrf.mxu0
      %v918 = vadd.f32 %v602, %v917
      %v919 = vpop.f32.mrf.mxu0
      %920 = vmatprep.mubr.f32.mxu0 0.0
      %921 = vmatmul.mubr.f32.gmra.mxu0 %v695
      %v922 = vpop.f32.mrf.mxu0
      %v923 = vadd.f32 %v602, %v922
      %v924 = vpop.f32.mrf.mxu0
      %925 = vmatprep.mubr.f32.mxu0 0.0
      %926 = vmatmul.mubr.f32.gmra.mxu0 %v698
      %v927 = vpop.f32.mrf.mxu0
      %v928 = vadd.f32 %v602, %v927
      %v929 = vpop.f32.mrf.mxu0
      %930 = vdwg.mxu0
      %vm931 = vcmask 130048
      %932 = vst.msk [vmem:[%s5] sm:$0xff] %vm931, %v773
      %933 = vst.msk [vmem:[%s5 + $0x8] sm:$0xff] %vm931, %v778
      %934 = vst.msk [vmem:[%s5 + $0x10] sm:$0xff] %vm931, %v783
      %935 = vst.msk [vmem:[%s5 + $0x18] sm:$0xff] %vm931, %v788
      %936 = vst.msk [vmem:[%s5 + $0x20] sm:$0xff] %vm931, %v793
      %937 = vst.msk [vmem:[%s5 + $0x28] sm:$0xff] %vm931, %v798
      %938 = vst.msk [vmem:[%s5 + $0x30] sm:$0xff] %vm931, %v803
      %939 = vst.msk [vmem:[%s5 + $0x38] sm:$0xff] %vm931, %v808
      %940 = vst.msk [vmem:[%s5 + $0x40] sm:$0xff] %vm931, %v813
      %941 = vst.msk [vmem:[%s5 + $0x48] sm:$0xff] %vm931, %v818
      %942 = vst.msk [vmem:[%s5 + $0x50] sm:$0xff] %vm931, %v823
      %943 = vst.msk [vmem:[%s5 + $0x58] sm:$0xff] %vm931, %v828
      %944 = vst.msk [vmem:[%s5 + $0x60] sm:$0xff] %vm931, %v833
      %945 = vst.msk [vmem:[%s5 + $0x68] sm:$0xff] %vm931, %v838
      %946 = vst.msk [vmem:[%s5 + $0x70] sm:$0xff] %vm931, %v843
      %947 = vst.msk [vmem:[%s5 + $0x78] sm:$0xff] %vm931, %v848
      %948 = vst.msk [vmem:[%s5 + $0x80] sm:$0xff] %vm931, %v853
      %949 = vst.msk [vmem:[%s5 + $0x88] sm:$0xff] %vm931, %v858
      %950 = vst.msk [vmem:[%s5 + $0x90] sm:$0xff] %vm931, %v863
      %951 = vst.msk [vmem:[%s5 + $0x98] sm:$0xff] %vm931, %v868
      %952 = vst.msk [vmem:[%s5 + $0xa0] sm:$0xff] %vm931, %v873
      %953 = vst.msk [vmem:[%s5 + $0xa8] sm:$0xff] %vm931, %v878
      %954 = vst.msk [vmem:[%s5 + $0xb0] sm:$0xff] %vm931, %v883
      %955 = vst.msk [vmem:[%s5 + $0xb8] sm:$0xff] %vm931, %v888
      %956 = vst.msk [vmem:[%s5 + $0xc0] sm:$0xff] %vm931, %v893
      %957 = vst.msk [vmem:[%s5 + $0xc8] sm:$0xff] %vm931, %v898
      %958 = vst.msk [vmem:[%s5 + $0xd0] sm:$0xff] %vm931, %v903
      %959 = vst.msk [vmem:[%s5 + $0xd8] sm:$0xff] %vm931, %v908
      %960 = vst.msk [vmem:[%s5 + $0xe0] sm:$0xff] %vm931, %v913
      %961 = vst.msk [vmem:[%s5 + $0xe8] sm:$0xff] %vm931, %v918
      %962 = vst.msk [vmem:[%s5 + $0xf0] sm:$0xff] %vm931, %v923
      %963 = vst.msk [vmem:[%s5 + $0xf8] sm:$0xff] %vm931, %v928
    $region33: #{gcn_finding_feature.1} parent=1 // pred_fallthru
      _
    // Predicated region
    $region34: #{gcn_finding_feature.1} parent=1 // pred_check
      _
    $region35: #{gcn_finding_feature.1} parent=1 // pred_check_branch
      %965 = sbr.rel (0) target = $region37
    $region36: #{gcn_finding_feature.1} parent=1 // pred_region
      _
    $region37: #{gcn_finding_feature.1} parent=1 // pred_fallthru
      _
    // Predicated region
    $region38: #{gcn_finding_feature.1} parent=1 // pred_check
      _
    $region39: #{gcn_finding_feature.1} parent=1 // pred_check_branch
      %967 = sbr.rel (0) target = $region41
    $region40: #{gcn_finding_feature.1} parent=1 // pred_region
      _
    $region41: #{gcn_finding_feature.1} parent=1 // pred_fallthru
      _
    %968 = vsyncpa [#allocation4], 1

</llo_original>
